<compile_context>
chip_gen: v5e
topology: v5e:2x2
jax: 0.10.0
libtpu: 0.0.40
codegen_flags: <defaults>
</compile_context>

<pallas_src>
import jax
import jax.numpy as jnp
from jax.experimental import pallas as pl
from jax.experimental.pallas import tpu as pltpu

_EPS_IN = 1e-3   # InstanceNorm2d eps from the module
_EPS_BN = 1e-5   # BatchNorm2d default eps


# ---------------- kernel 1: per-(n, c) instance-norm statistics ----------------
def _stats_kernel(x_ref, m_ref, v_ref):
    x = x_ref[0]                                        # (C, H)
    m = jnp.mean(x, axis=-1, keepdims=True)             # (C, 1)
    msq = jnp.mean(x * x, axis=-1, keepdims=True)       # (C, 1)  fused E[x^2] pass
    m_ref[0] = m
    v_ref[0] = msq - m * m                              # biased variance


# ------- kernel 2: fused (IN+BN) affine + ReLU, 1x1 conv, softmax, pooling ------
def _pool_kernel(x_ref, scale_ref, shift_ref, w_ref, b_ref, out_ref):
    x = x_ref[0]                                        # (C, H)  original input
    # Folded InstanceNorm + BatchNorm (+ affine): one mul+add pass, then ReLU.
    y = jnp.maximum(x * scale_ref[0] + shift_ref[0], 0.0)             # (C, H)
    # 1x1 conv == channel matmul on the MXU, points axis (H) on lanes.
    # (the per-K bias is shift-invariant under the softmax over H, but is kept
    #  for exact semantic fidelity — it is a single negligible broadcast add)
    embed = jnp.dot(w_ref[...], y,
                    preferred_element_type=jnp.float32) + b_ref[...]  # (K, H)
    # Softmax over the points axis (lane reduction -> XLU, exp -> EUP).
    mx = jnp.max(embed, axis=-1, keepdims=True)
    e = jnp.exp(embed - mx)
    s = e * pl.reciprocal(jnp.sum(e, axis=-1, keepdims=True), approx=False)  # (K, H)
    # Differentiable pooling: out[c, k] = sum_h x[c, h] * s[k, h]
    # (contract the lane axis of both operands -> no transposes needed)
    out_ref[0] = jax.lax.dot_general(
        x, s, (((1,), (1,)), ((), ())), preferred_element_type=jnp.float32)


def _vmem_limit(per_block_bytes):
    # Per-block working set * headroom (double-buffering + compiler scratch),
    # capped at the smallest physical VMEM across targets (v7x: 64 MiB).
    return int(min(max(6 * per_block_bytes + (4 << 20), 16 << 20), 64 << 20))


def diff_pool_forward(x_nchw, params):
    """diff_pool forward.  x_nchw: (N, C, H, 1) float32 -> (N, C, K, 1)."""
    N, C, H, W = x_nchw.shape
    assert W == 1, "diff_pool expects point-style input with W == 1"
    K = params["w"].shape[0]

    x = x_nchw.reshape(N, C, H).astype(jnp.float32)

    # -------- pass 1: per-(n, c) mean / variance over the points axis ---------
    stats_block = 4 * (C * H + 4 * C)
    m, v = pl.pallas_call(
        _stats_kernel,
        out_shape=(jax.ShapeDtypeStruct((N, C, 1), jnp.float32),
                   jax.ShapeDtypeStruct((N, C, 1), jnp.float32)),
        grid=(N,),
        in_specs=[pl.BlockSpec((1, C, H), lambda n: (n, 0, 0))],
        out_specs=(pl.BlockSpec((1, C, 1), lambda n: (n, 0, 0)),
                   pl.BlockSpec((1, C, 1), lambda n: (n, 0, 0))),
        compiler_params=pltpu.CompilerParams(
            dimension_semantics=("parallel",),
            vmem_limit_bytes=_vmem_limit(stats_block)),
        cost_estimate=pl.CostEstimate(
            flops=4 * N * C * H, transcendentals=0,
            bytes_accessed=4 * N * C * H + 8 * N * C),
    )(x)

    # -------- tiny O(N*C) glue: IN -> BN algebra + affine folding -------------
    # The IN output has zero per-channel batch mean; its per-channel batch
    # variance is mean_n( v / (v + eps_in) ), so the BN training statistics
    # never require touching the big tensor again.
    r_in = jax.lax.rsqrt(v + _EPS_IN)                              # (N, C, 1)
    var_bn = jnp.mean(v / (v + _EPS_IN), axis=0, keepdims=True)    # (1, C, 1)
    r_bn = jax.lax.rsqrt(var_bn + _EPS_BN)                         # (1, C, 1)
    gamma = params["bn_gamma"].reshape(1, C, 1).astype(jnp.float32)
    beta = params["bn_beta"].reshape(1, C, 1).astype(jnp.float32)
    scale = gamma * r_bn * r_in                                    # (N, C, 1)
    shift = beta - scale * m                                       # (N, C, 1)

    w = params["w"].reshape(K, C).astype(jnp.float32)   # Conv2d weight (K, C, 1, 1)
    b = params["b"].reshape(K, 1).astype(jnp.float32)

    # -------- pass 2: fused affine/ReLU/conv/softmax/pool, grid over batch ----
    pool_block = 4 * (2 * C * H + 3 * K * H + K * C + 2 * C + 2 * C * K + K)
    out = pl.pallas_call(
        _pool_kernel,
        out_shape=jax.ShapeDtypeStruct((N, C, K), jnp.float32),
        grid=(N,),
        in_specs=[pl.BlockSpec((1, C, H), lambda n: (n, 0, 0)),
                  pl.BlockSpec((1, C, 1), lambda n: (n, 0, 0)),
                  pl.BlockSpec((1, C, 1), lambda n: (n, 0, 0)),
                  pl.BlockSpec((K, C), lambda n: (0, 0)),
                  pl.BlockSpec((K, 1), lambda n: (0, 0))],
        out_specs=pl.BlockSpec((1, C, K), lambda n: (n, 0, 0)),
        compiler_params=pltpu.CompilerParams(
            dimension_semantics=("parallel",),
            vmem_limit_bytes=_vmem_limit(pool_block)),
        cost_estimate=pl.CostEstimate(
            flops=N * (2 * K * C * H + 2 * C * K * H + 3 * C * H + 4 * K * H),
            transcendentals=N * K * H,
            bytes_accessed=4 * (N * C * H + N * C * K + K * C + 4 * N * C + K)),
    )(x, scale, shift, w, b)

    return out.reshape(N, C, K, 1)


# ---------------- pure-JAX reference (mirrors the PyTorch module) ---------------
def diff_pool_ref(x, params):
    # x: (N, C, H, 1)
    m = x.mean(axis=(2, 3), keepdims=True)
    v = ((x - m) ** 2).mean(axis=(2, 3), keepdims=True)
    z = (x - m) * jax.lax.rsqrt(v + _EPS_IN)                       # InstanceNorm2d
    bm = z.mean(axis=(0, 2, 3), keepdims=True)
    bv = ((z - bm) ** 2).mean(axis=(0, 2, 3), keepdims=True)
    g = params["bn_gamma"].reshape(1, -1, 1, 1)
    be = params["bn_beta"].reshape(1, -1, 1, 1)
    z = g * (z - bm) * jax.lax.rsqrt(bv + _EPS_BN) + be            # BatchNorm2d (train)
    z = jnp.maximum(z, 0.0)                                        # ReLU
    embed = (jnp.einsum("nchw,kc->nkhw", z, params["w"])
             + params["b"].reshape(1, -1, 1, 1))                   # Conv2d 1x1
    S = jax.nn.softmax(embed, axis=2)[..., 0]                      # (N, K, H)
    out = jnp.einsum("nch,nkh->nck", x[..., 0], S)                 # (N, C, K)
    return out[..., None]


if __name__ == "__main__":
    key = jax.random.PRNGKey(0)
    N, C, H, W = 2, 4, 256, 1      # (batch, in_channel, num_points, 1)
    K = 8                          # output_points

    ks = jax.random.split(key, 5)
    x = jax.random.normal(ks[0], (N, C, H, W), dtype=jnp.float32)
    params = {
        "bn_gamma": 1.0 + 0.1 * jax.random.normal(ks[1], (C,), jnp.float32),
        "bn_beta": 0.1 * jax.random.normal(ks[2], (C,), jnp.float32),
        "w": 0.3 * jax.random.normal(ks[3], (K, C), jnp.float32),   # Conv2d(C,K,1) weight
        "b": 0.1 * jax.random.normal(ks[4], (K,), jnp.float32),
    }

    fwd = jax.jit(diff_pool_forward)
    out = fwd(x, params)
    jax.block_until_ready(out)

    ref = diff_pool_ref(x, params)
    assert out.shape == (N, C, K, 1)
    assert jnp.allclose(out, ref, rtol=1e-4, atol=1e-4), "kernel/reference mismatch"

    print("KERNEL_OK")
</pallas_src>

<mosaic_0001>
module attributes {stable_mosaic.version = 11 : i64} {
  func.func @_stats_kernel(%arg0: i32, %arg1: memref<1x4x256xf32, #tpu.memory_space<vmem>>, %arg2: memref<1x4x1xf32, #tpu.memory_space<vmem>>, %arg3: memref<1x4x1xf32, #tpu.memory_space<vmem>>) attributes {dimension_semantics = [#tpu.dimension_semantics<parallel>], iteration_bounds = array<i64: 2>, scalar_prefetch = 0 : i64, scratch_operands = 0 : i64, tpu.core_type = #tpu.core_type<tc>, window_params = [{transform_indices = @transform_0, window_bounds = array<i64: 1, 4, 256>}, {transform_indices = @transform_1, window_bounds = array<i64: 1, 4, 1>}, {transform_indices = @transform_2, window_bounds = array<i64: 1, 4, 1>}]} {
    %c0 = arith.constant 0 : index
    %c0_0 = arith.constant 0 : index
    %c0_1 = arith.constant 0 : index
    %0 = vector.load %arg1[%c0, %c0_0, %c0_1] : memref<1x4x256xf32, #tpu.memory_space<vmem>>, vector<1x4x256xf32>
    %1 = vector.shape_cast %0 : vector<1x4x256xf32> to vector<4x256xf32>
    %cst = arith.constant dense<0.000000e+00> : vector<4xf32>
    %2 = vector.multi_reduction <add>, %1, %cst [1] : vector<4x256xf32> to vector<4xf32>
    %3 = vector.shape_cast %2 : vector<4xf32> to vector<4x1xf32>
    %cst_2 = arith.constant 2.560000e+02 : f32
    %4 = vector.broadcast %cst_2 : f32 to vector<4x1xf32>
    %5 = arith.divf %3, %4 : vector<4x1xf32>
    %6 = arith.mulf %1, %1 : vector<4x256xf32>
    %cst_3 = arith.constant dense<0.000000e+00> : vector<4xf32>
    %7 = vector.multi_reduction <add>, %6, %cst_3 [1] : vector<4x256xf32> to vector<4xf32>
    %8 = vector.shape_cast %7 : vector<4xf32> to vector<4x1xf32>
    %cst_4 = arith.constant 2.560000e+02 : f32
    %9 = vector.broadcast %cst_4 : f32 to vector<4x1xf32>
    %10 = arith.divf %8, %9 : vector<4x1xf32>
    %c0_5 = arith.constant 0 : index
    %c0_6 = arith.constant 0 : index
    %c0_7 = arith.constant 0 : index
    %11 = vector.load %arg2[%c0_5, %c0_6, %c0_7] : memref<1x4x1xf32, #tpu.memory_space<vmem>>, vector<1x4x1xf32>
    %12 = vector.shape_cast %11 : vector<1x4x1xf32> to vector<4x1xf32>
    %13 = vector.shape_cast %5 : vector<4x1xf32> to vector<1x4x1xf32>
    tpu.vector_store %arg2[%c0_5, %c0_6, %c0_7], %13 {strides = array<i32>} : memref<1x4x1xf32, #tpu.memory_space<vmem>>, vector<1x4x1xf32>,
    %14 = arith.mulf %5, %5 : vector<4x1xf32>
    %15 = arith.subf %10, %14 : vector<4x1xf32>
    %c0_8 = arith.constant 0 : index
    %c0_9 = arith.constant 0 : index
    %c0_10 = arith.constant 0 : index
    %16 = vector.load %arg3[%c0_8, %c0_9, %c0_10] : memref<1x4x1xf32, #tpu.memory_space<vmem>>, vector<1x4x1xf32>
    %17 = vector.shape_cast %16 : vector<1x4x1xf32> to vector<4x1xf32>
    %18 = vector.shape_cast %15 : vector<4x1xf32> to vector<1x4x1xf32>
    tpu.vector_store %arg3[%c0_8, %c0_9, %c0_10], %18 {strides = array<i32>} : memref<1x4x1xf32, #tpu.memory_space<vmem>>, vector<1x4x1xf32>,
    return
  }
  func.func @transform_0(%arg0: i32) -> (i32, i32, i32) {
    %c0_i32 = arith.constant 0 : i32
    %c0_i32_0 = arith.constant 0 : i32
    %c0_i32_1 = arith.constant 0 : i32
    return %arg0, %c0_i32, %c0_i32_0 : i32, i32, i32
  }
  func.func @transform_1(%arg0: i32) -> (i32, i32, i32) {
    %c0_i32 = arith.constant 0 : i32
    %c0_i32_0 = arith.constant 0 : i32
    %c0_i32_1 = arith.constant 0 : i32
    return %arg0, %c0_i32, %c0_i32_0 : i32, i32, i32
  }
  func.func @transform_2(%arg0: i32) -> (i32, i32, i32) {
    %c0_i32 = arith.constant 0 : i32
    %c0_i32_0 = arith.constant 0 : i32
    %c0_i32_1 = arith.constant 0 : i32
    return %arg0, %c0_i32, %c0_i32_0 : i32, i32, i32
  }
}

module attributes {stable_mosaic.version = 11 : i64} {
  func.func @_pool_kernel(%arg0: i32, %arg1: memref<1x4x256xf32, #tpu.memory_space<vmem>>, %arg2: memref<1x4x1xf32, #tpu.memory_space<vmem>>, %arg3: memref<1x4x1xf32, #tpu.memory_space<vmem>>, %arg4: memref<8x4xf32, #tpu.memory_space<vmem>>, %arg5: memref<8x1xf32, #tpu.memory_space<vmem>>, %arg6: memref<1x4x8xf32, #tpu.memory_space<vmem>>) attributes {dimension_semantics = [#tpu.dimension_semantics<parallel>], iteration_bounds = array<i64: 2>, scalar_prefetch = 0 : i64, scratch_operands = 0 : i64, tpu.core_type = #tpu.core_type<tc>, window_params = [{transform_indices = @transform_0, window_bounds = array<i64: 1, 4, 256>}, {transform_indices = @transform_1, window_bounds = array<i64: 1, 4, 1>}, {transform_indices = @transform_2, window_bounds = array<i64: 1, 4, 1>}, {pipeline_mode = #tpu.pipeline_mode<synchronous>, transform_indices = @transform_3, window_bounds = array<i64: 8, 4>}, {pipeline_mode = #tpu.pipeline_mode<synchronous>, transform_indices = @transform_4, window_bounds = array<i64: 8, 1>}, {transform_indices = @transform_5, window_bounds = array<i64: 1, 4, 8>}]} {
    %c0 = arith.constant 0 : index
    %c0_0 = arith.constant 0 : index
    %c0_1 = arith.constant 0 : index
    %0 = vector.load %arg1[%c0, %c0_0, %c0_1] : memref<1x4x256xf32, #tpu.memory_space<vmem>>, vector<1x4x256xf32>
    %1 = vector.shape_cast %0 : vector<1x4x256xf32> to vector<4x256xf32>
    %c0_2 = arith.constant 0 : index
    %c0_3 = arith.constant 0 : index
    %c0_4 = arith.constant 0 : index
    %2 = vector.load %arg2[%c0_2, %c0_3, %c0_4] : memref<1x4x1xf32, #tpu.memory_space<vmem>>, vector<1x4x1xf32>
    %3 = vector.shape_cast %2 : vector<1x4x1xf32> to vector<4x1xf32>
    %4 = vector.broadcast %3 : vector<4x1xf32> to vector<4x256xf32>
    %5 = arith.mulf %1, %4 : vector<4x256xf32>
    %c0_5 = arith.constant 0 : index
    %c0_6 = arith.constant 0 : index
    %c0_7 = arith.constant 0 : index
    %6 = vector.load %arg3[%c0_5, %c0_6, %c0_7] : memref<1x4x1xf32, #tpu.memory_space<vmem>>, vector<1x4x1xf32>
    %7 = vector.shape_cast %6 : vector<1x4x1xf32> to vector<4x1xf32>
    %8 = vector.broadcast %7 : vector<4x1xf32> to vector<4x256xf32>
    %9 = arith.addf %5, %8 : vector<4x256xf32>
    %cst = arith.constant 0.000000e+00 : f32
    %10 = vector.broadcast %cst : f32 to vector<4x256xf32>
    %11 = arith.maximumf %9, %10 : vector<4x256xf32>
    %c0_8 = arith.constant 0 : index
    %c0_9 = arith.constant 0 : index
    %12 = vector.load %arg4[%c0_8, %c0_9] : memref<8x4xf32, #tpu.memory_space<vmem>>, vector<8x4xf32>
    %cst_10 = arith.constant dense<0.000000e+00> : vector<8x256xf32>
    %13 = tpu.matmul %12, %11, %cst_10 {dimension_numbers = #tpu.dot_dimension_numbers<[1], [0], [0], [1], [0, 0, 1, 1], [], []>} : vector<8x4xf32>, vector<4x256xf32>, vector<8x256xf32> -> vector<8x256xf32>
    %c0_11 = arith.constant 0 : index
    %c0_12 = arith.constant 0 : index
    %14 = vector.load %arg5[%c0_11, %c0_12] : memref<8x1xf32, #tpu.memory_space<vmem>>, vector<8x1xf32>
    %15 = vector.broadcast %14 : vector<8x1xf32> to vector<8x256xf32>
    %16 = arith.addf %13, %15 : vector<8x256xf32>
    %cst_13 = arith.constant dense<0xFF800000> : vector<8xf32>
    %17 = vector.multi_reduction <maximumf>, %16, %cst_13 [1] : vector<8x256xf32> to vector<8xf32>
    %18 = vector.shape_cast %17 : vector<8xf32> to vector<8x1xf32>
    %19 = vector.broadcast %18 : vector<8x1xf32> to vector<8x256xf32>
    %20 = arith.subf %16, %19 : vector<8x256xf32>
    %21 = math.exp %20 : vector<8x256xf32>
    %cst_14 = arith.constant dense<0.000000e+00> : vector<8xf32>
    %22 = vector.multi_reduction <add>, %21, %cst_14 [1] : vector<8x256xf32> to vector<8xf32>
    %23 = vector.shape_cast %22 : vector<8xf32> to vector<8x1xf32>
    %24 = tpu.reciprocal %23 : vector<8x1xf32> -> vector<8x1xf32>
    %25 = vector.broadcast %24 : vector<8x1xf32> to vector<8x256xf32>
    %26 = arith.mulf %21, %25 : vector<8x256xf32>
    %cst_15 = arith.constant dense<0.000000e+00> : vector<4x8xf32>
    %27 = tpu.matmul %1, %26, %cst_15 {dimension_numbers = #tpu.dot_dimension_numbers<[1], [1], [0], [0], [0, 0, 1, 0], [], []>} : vector<4x256xf32>, vector<8x256xf32>, vector<4x8xf32> -> vector<4x8xf32>
    %c0_16 = arith.constant 0 : index
    %c0_17 = arith.constant 0 : index
    %c0_18 = arith.constant 0 : index
    %28 = vector.load %arg6[%c0_16, %c0_17, %c0_18] : memref<1x4x8xf32, #tpu.memory_space<vmem>>, vector<1x4x8xf32>
    %29 = vector.shape_cast %28 : vector<1x4x8xf32> to vector<4x8xf32>
    %30 = vector.shape_cast %27 : vector<4x8xf32> to vector<1x4x8xf32>
    tpu.vector_store %arg6[%c0_16, %c0_17, %c0_18], %30 {strides = array<i32>} : memref<1x4x8xf32, #tpu.memory_space<vmem>>, vector<1x4x8xf32>,
    return
  }
  func.func @transform_0(%arg0: i32) -> (i32, i32, i32) {
    %c0_i32 = arith.constant 0 : i32
    %c0_i32_0 = arith.constant 0 : i32
    %c0_i32_1 = arith.constant 0 : i32
    return %arg0, %c0_i32, %c0_i32_0 : i32, i32, i32
  }
  func.func @transform_1(%arg0: i32) -> (i32, i32, i32) {
    %c0_i32 = arith.constant 0 : i32
    %c0_i32_0 = arith.constant 0 : i32
    %c0_i32_1 = arith.constant 0 : i32
    return %arg0, %c0_i32, %c0_i32_0 : i32, i32, i32
  }
  func.func @transform_2(%arg0: i32) -> (i32, i32, i32) {
    %c0_i32 = arith.constant 0 : i32
    %c0_i32_0 = arith.constant 0 : i32
    %c0_i32_1 = arith.constant 0 : i32
    return %arg0, %c0_i32, %c0_i32_0 : i32, i32, i32
  }
  func.func @transform_3(%arg0: i32) -> (i32, i32) {
    %c0_i32 = arith.constant 0 : i32
    %c0_i32_0 = arith.constant 0 : i32
    %c0_i32_1 = arith.constant 0 : i32
    return %c0_i32, %c0_i32_0 : i32, i32
  }
  func.func @transform_4(%arg0: i32) -> (i32, i32) {
    %c0_i32 = arith.constant 0 : i32
    %c0_i32_0 = arith.constant 0 : i32
    %c0_i32_1 = arith.constant 0 : i32
    return %c0_i32, %c0_i32_0 : i32, i32
  }
  func.func @transform_5(%arg0: i32) -> (i32, i32, i32) {
    %c0_i32 = arith.constant 0 : i32
    %c0_i32_0 = arith.constant 0 : i32
    %c0_i32_1 = arith.constant 0 : i32
    return %arg0, %c0_i32, %c0_i32_0 : i32, i32, i32
  }
}

</mosaic_0001>

<llo_original>
// kernel: diff_pool_forward.2
$region0: #{diff_pool_forward.2}
  #allocation0 [shape = 'u32[]', space=smem, size = 0x4, offset = 0x4, fixed_abs, tag = 'smem constant byte address 0x4 - core index']
  #allocation1 [shape = 'u32[72,128]{1,0:T(1,128)}', space=vmem, size = 0x9000, scoped, tag = 'internal scratch']
  %s0 = inlined_call_operand.vmem [shape: f32[2,4,256], index: 0, kind: input, shape index: {}]
  %s1 = inlined_call_operand.vmem [shape: f32[2,4,1], index: 1, kind: output, shape index: {0}]
  %s2 = inlined_call_operand.vmem [shape: f32[2,4,1], index: 2, kind: output, shape index: {1}]
  %3 = xla_tuple %s1, %s2
  %s4 = sld [smem:[#allocation0]]
  $region45: #{diff_pool_forward.2} parent=0
    _
  %s6 = ssub.s32 1, %s4
  %s7 = scalar_select 0, %s6, %s4
  loop: start=0, step=1, limit=4
  $region2: #{diff_pool_forward.2} parent=0 // loop_pre_header
    _
  $region3: #{diff_pool_forward.2} parent=0 // loop_header
    %s9 = sphi 0, %s13
    %p10 = scmp.ge.s32.totalorder %s9, 4
    %s19 = sphi 0, %s21
    %s22 = sphi 0, %s19
    %s23 = sphi 0, %s22
    %s39 = sphi 0, %s23
    %s45 = sphi 0, %s47
    %s48 = sphi 0, %s45
    %s49 = sphi 0, %s48
    %s65 = sphi 0, %s49
    %s71 = sphi 0, %s73
    %s74 = sphi 0, %s71
    %s75 = sphi 0, %s74
    %s91 = sphi 0, %s75
  $region4: #{diff_pool_forward.2} parent=0 // loop_header_branch
    %12 = sbr.rel (%p10) target = $region8
  $region5: #{diff_pool_forward.2} parent=0 // loop_body
    %s14 = ssub.s32 %s9, 1
    %s15 = ssub.s32 %s9, 2
    %s16 = sadd.s32 %s9, 1
    %s17 = ssub.s32 %s9, %s16
    %p18 = scmp.eq.s32.totalorder %s17, 0
    %s20 = sadd.s32 %s19, 1
    %s21 = scalar_select %p18, %s19, %s20
    %p24 = pneg %p18
    %p25 = scmp.eq.s32.totalorder %s9, 1
    %p26 = por %p24, %p25
    %p27 = scmp.ne.s32.totalorder %s19, %s22
    %p28 = scmp.eq.s32.totalorder %s9, 0
    %p29 = por %p27, %p28
    %p30 = scmp.ne.s32.totalorder %s19, %s22
    %p31 = scmp.eq.s32.totalorder %s14, 1
    %p32 = por %p30, %p31
    %p33 = scmp.ne.s32.totalorder %s22, %s23
    %p34 = scmp.eq.s32.totalorder %s14, 0
    %p35 = por %p33, %p34
    %p36 = scmp.ne.s32.totalorder %s22, %s23
    %p37 = scmp.eq.s32.totalorder %s15, 1
    %p38 = por %p36, %p37
    %p40 = scmp.ne.s32.totalorder %s23, %s39
    %p41 = scmp.eq.s32.totalorder %s15, 0
    %p42 = por %p40, %p41
    %s43 = ssub.s32 %s9, %s16
    %p44 = scmp.eq.s32.totalorder %s43, 0
    %s46 = sadd.s32 %s45, 1
    %s47 = scalar_select %p44, %s45, %s46
    %p50 = pneg %p44
    %p51 = scmp.eq.s32.totalorder %s9, 1
    %p52 = por %p50, %p51
    %p53 = scmp.ne.s32.totalorder %s45, %s48
    %p54 = scmp.eq.s32.totalorder %s9, 0
    %p55 = por %p53, %p54
    %p56 = scmp.ne.s32.totalorder %s45, %s48
    %p57 = scmp.eq.s32.totalorder %s14, 1
    %p58 = por %p56, %p57
    %p59 = scmp.ne.s32.totalorder %s48, %s49
    %p60 = scmp.eq.s32.totalorder %s14, 0
    %p61 = por %p59, %p60
    %p62 = scmp.ne.s32.totalorder %s48, %s49
    %p63 = scmp.eq.s32.totalorder %s15, 1
    %p64 = por %p62, %p63
    %p66 = scmp.ne.s32.totalorder %s49, %s65
    %p67 = scmp.eq.s32.totalorder %s15, 0
    %p68 = por %p66, %p67
    %s69 = ssub.s32 %s9, %s16
    %p70 = scmp.eq.s32.totalorder %s69, 0
    %s72 = sadd.s32 %s71, 1
    %s73 = scalar_select %p70, %s71, %s72
    %p76 = pneg %p70
    %p77 = scmp.eq.s32.totalorder %s9, 1
    %p78 = por %p76, %p77
    %p79 = scmp.ne.s32.totalorder %s71, %s74
    %p80 = scmp.eq.s32.totalorder %s9, 0
    %p81 = por %p79, %p80
    %p82 = scmp.ne.s32.totalorder %s71, %s74
    %p83 = scmp.eq.s32.totalorder %s14, 1
    %p84 = por %p82, %p83
    %p85 = scmp.ne.s32.totalorder %s74, %s75
    %p86 = scmp.eq.s32.totalorder %s14, 0
    %p87 = por %p85, %p86
    %p88 = scmp.ne.s32.totalorder %s74, %s75
    %p89 = scmp.eq.s32.totalorder %s15, 1
    %p90 = por %p88, %p89
    %p92 = scmp.ne.s32.totalorder %s75, %s91
    %p93 = scmp.eq.s32.totalorder %s15, 0
    %p94 = por %p92, %p93
    %p95 = scmp.le.s32.totalorder 1, %s9
    %p96 = scmp.lt.s32.totalorder %s9, 3
    %p97 = pnand %p95, %p96
    %p98 = pneg %p97
    // Predicated region
    $region9: #{diff_pool_forward.2} parent=5 // pred_check
      _
    $region10: #{diff_pool_forward.2} parent=5 // pred_check_branch
      %100 = sbr.rel (%p97) target = $region12
    $region11: #{diff_pool_forward.2} parent=5 // pred_region
      %s101 = ssub.s32 %s9, 1
    $region12: #{diff_pool_forward.2} parent=5 // pred_fallthru
      _
    %p102 = scmp.lt.s32.totalorder %s9, 2
    // Predicated region
    $region13: #{diff_pool_forward.2} parent=5 // pred_check
      %p103 = pneg %p102
    $region14: #{diff_pool_forward.2} parent=5 // pred_check_branch
      %105 = sbr.rel (%p103) target = $region16
    $region15: #{diff_pool_forward.2} parent=5 // pred_region
      // Predicated region
      $region17: #{diff_pool_forward.2} parent=15 // pred_check
        %p106 = pneg %p29
      $region18: #{diff_pool_forward.2} parent=15 // pred_check_branch
        %108 = sbr.rel (%p106) target = $region20
      $region19: #{diff_pool_forward.2} parent=15 // pred_region
        %p109 = scmp.lt.s32.totalorder %s9, 1
        %s110 = scalar_select %p109, %s9, 1
        %s111 = smul.addr %s110, 2
        %s112 = smul.addr %s111, 4
        %s113 = scalar_lea.vmem %s0, %s112
      $region20: #{diff_pool_forward.2} parent=15 // pred_fallthru
        _
    $region16: #{diff_pool_forward.2} parent=5 // pred_fallthru
      _
    %p114 = scmp.le.s32.totalorder 1, %s9
    %p115 = scmp.lt.s32.totalorder %s9, 3
    %p116 = pnand %p114, %p115
    %p117 = pneg %p116
    // Predicated region
    $region21: #{diff_pool_forward.2} parent=5 // pred_check
      _
    $region22: #{diff_pool_forward.2} parent=5 // pred_check_branch
      %119 = sbr.rel (%p116) target = $region24
    $region23: #{diff_pool_forward.2} parent=5 // pred_region
      %s120 = ssub.s32 %s9, 1
      %p121 = scmp.lt.s32.totalorder %s14, 1
      %s122 = scalar_select %p121, %s14, 1
      %s123 = smul.addr %s122, 2
      %s124 = smul.addr %s123, 4
      %s125 = scalar_lea.vmem %s0, %s124
      %p126 = pneg %p35
      %p127 = pneg %p32
      %p128 = pneg %p61
      %p129 = pneg %p58
      %p130 = scmp.lt.s32.totalorder %s14, 1
      %s131 = scalar_select %p130, %s14, 1
      %s132 = smul.addr %s131, 4
      %s133 = scalar_lea.vmem %s1, %s132
      %p134 = pneg %p87
      %p135 = pneg %p84
      %p136 = scmp.lt.s32.totalorder %s14, 1
      %s137 = scalar_select %p136, %s14, 1
      %s138 = smul.addr %s137, 4
      %s139 = scalar_lea.vmem %s2, %s138
      %p140 = scmp.lt.s32.totalorder %s14, 1
      %s141 = scalar_select %p140, %s14, 1
      %s142 = smul.addr %s141, 2
      %s143 = smul.addr %s142, 4
      %s144 = scalar_lea.vmem %s0, %s143
      %p145 = scmp.lt.s32.totalorder %s14, 1
      %s146 = scalar_select %p145, %s14, 1
      %s147 = smul.addr %s146, 4
      %s148 = scalar_lea.vmem %s1, %s147
      %p149 = scmp.lt.s32.totalorder %s14, 1
      %s150 = scalar_select %p149, %s14, 1
      %s151 = smul.addr %s150, 4
      %s152 = scalar_lea.vmem %s2, %s151
      %v153 = vld [vmem:[%s144] sm:$0xff]
      %155 = vst [vmem:[#allocation1] ss:$2 sm:$0xff] %v153
      %v156 = vld.sshfl [vmem:[#allocation1] sm:$0xff pattern:$0x75316420]
      %v157 = vld.sshfl [vmem:[#allocation1 + $0x8] sm:$0xff pattern:$0x75316420]
      %vm160 = vcmask 1043456
      %v161 = vsel %vm160, %v156, 0.0
      %v162 = vsel %vm160, %v157, 0.0
      %v163 = vadd.f32 %v161, %v162
      %164 = vadd.xlane.f32.xlu0 %v163
      %v165 = vpop.xlane.xlu0 %164
      %v166 = vrcp.pop 256.0
      %v167 = vmul.f32 256.0, %v166
      %v168 = vsub.f32 1.0, %v167
      %v169 = vmul.f32 %v166, %v168
      %v170 = vadd.f32 %v166, %v169
      %vm171 = vweird.f32 %v166
      %v172 = vsel %vm171, %v166, %v170
      %v173 = vmul.f32 %v165, %v172
      %v174 = vmul.f32 %v153, %v153
      %176 = vst [vmem:[#allocation1] ss:$2 sm:$0xff] %v174
      %v177 = vld.sshfl [vmem:[#allocation1] sm:$0xff pattern:$0x75316420]
      %v178 = vld.sshfl [vmem:[#allocation1 + $0x8] sm:$0xff pattern:$0x75316420]
      %v181 = vsel %vm160, %v177, 0.0
      %v182 = vsel %vm160, %v178, 0.0
      %v183 = vadd.f32 %v181, %v182
      %184 = vadd.xlane.f32.xlu0 %v183
      %v185 = vpop.xlane.xlu0 %184
      %v186 = vmul.f32 %v185, %v172
      %vm187 = vcmask 3072
      %188 = vst.msk [vmem:[%s148] sm:$0xf] %vm187, %v173
      %v189 = vmul.f32 %v173, %v173
      %v190 = vsub.f32 %v186, %v189
      %191 = vst.msk [vmem:[%s152] sm:$0xf] %vm187, %v190
      %p192 = scmp.lt.s32.totalorder %s14, 1
      %s193 = scalar_select %p192, %s14, 1
      %s194 = smul.addr %s193, 4
      %s195 = scalar_lea.vmem %s1, %s194
      %p196 = scmp.lt.s32.totalorder %s14, 1
      %s197 = scalar_select %p196, %s14, 1
      %s198 = smul.addr %s197, 4
      %s199 = scalar_lea.vmem %s2, %s198
      // Predicated region
      $region25: #{diff_pool_forward.2} parent=23 // pred_check
        %p200 = pneg %p58
      $region26: #{diff_pool_forward.2} parent=23 // pred_check_branch
        %202 = sbr.rel (%p200) target = $region28
      $region27: #{diff_pool_forward.2} parent=23 // pred_region
        _
      $region28: #{diff_pool_forward.2} parent=23 // pred_fallthru
        _
      // Predicated region
      $region29: #{diff_pool_forward.2} parent=23 // pred_check
        %p203 = pneg %p84
      $region30: #{diff_pool_forward.2} parent=23 // pred_check_branch
        %205 = sbr.rel (%p203) target = $region32
      $region31: #{diff_pool_forward.2} parent=23 // pred_region
        _
      $region32: #{diff_pool_forward.2} parent=23 // pred_fallthru
        _
    $region24: #{diff_pool_forward.2} parent=5 // pred_fallthru
      _
    %p206 = scmp.le.s32.totalorder 2, %s9
    // Predicated region
    $region33: #{diff_pool_forward.2} parent=5 // pred_check
      %p207 = pneg %p206
    $region34: #{diff_pool_forward.2} parent=5 // pred_check_branch
      %209 = sbr.rel (%p207) target = $region36
    $region35: #{diff_pool_forward.2} parent=5 // pred_region
      %s210 = ssub.s32 %s9, 2
      // Predicated region
      $region37: #{diff_pool_forward.2} parent=35 // pred_check
        %p211 = pneg %p64
      $region38: #{diff_pool_forward.2} parent=35 // pred_check_branch
        %213 = sbr.rel (%p211) target = $region40
      $region39: #{diff_pool_forward.2} parent=35 // pred_region
        %p214 = scmp.lt.s32.totalorder %s15, 1
        %s215 = scalar_select %p214, %s15, 1
        %s216 = smul.addr %s215, 4
        %s217 = scalar_lea.vmem %s1, %s216
      $region40: #{diff_pool_forward.2} parent=35 // pred_fallthru
        _
      // Predicated region
      $region41: #{diff_pool_forward.2} parent=35 // pred_check
        %p218 = pneg %p90
      $region42: #{diff_pool_forward.2} parent=35 // pred_check_branch
        %220 = sbr.rel (%p218) target = $region44
      $region43: #{diff_pool_forward.2} parent=35 // pred_region
        %p221 = scmp.lt.s32.totalorder %s15, 1
        %s222 = scalar_select %p221, %s15, 1
        %s223 = smul.addr %s222, 4
        %s224 = scalar_lea.vmem %s2, %s223
      $region44: #{diff_pool_forward.2} parent=35 // pred_fallthru
        _
    $region36: #{diff_pool_forward.2} parent=5 // pred_fallthru
      _
  $region6: #{diff_pool_forward.2} parent=0 // loop_footer
    %s13 = sadd.s32 1, %s9
  $region7: #{diff_pool_forward.2} parent=0 // loop_footer_branch
    %8 = sbr.rel target = $region3
  $region8: #{diff_pool_forward.2} parent=0 // loop_exit
    _

// kernel: diff_pool_forward.3
$region0: #{diff_pool_forward.3}
  #allocation0 [shape = 'u32[]', space=smem, size = 0x4, offset = 0x4, fixed_abs, tag = 'smem constant byte address 0x4 - core index']
  #allocation1 [shape = 'u32[72,128]{1,0:T(1,128)}', space=vmem, size = 0x9000, scoped, tag = 'internal scratch']
  %s0 = inlined_call_operand.vmem [shape: f32[2,4,256], index: 0, kind: input, shape index: {}]
  %s1 = inlined_call_operand.vmem [shape: f32[2,4,1], index: 1, kind: input, shape index: {}]
  %s2 = inlined_call_operand.vmem [shape: f32[2,4,1], index: 2, kind: input, shape index: {}]
  %s3 = inlined_call_operand.vmem [shape: f32[8,4], index: 3, kind: input, shape index: {}]
  %s4 = inlined_call_operand.vmem [shape: f32[8,1], index: 4, kind: input, shape index: {}]
  %s5 = inlined_call_operand.hbm [shape: f32[2,4,8], index: 5, kind: output, shape index: {}]
  %s6 = sld [smem:[#allocation0]]
  $region53: #{diff_pool_forward.3} parent=0
    _
  %s8 = ssub.s32 1, %s6
  %s9 = scalar_select 0, %s8, %s6
  $region1: #{diff_pool_forward.3} parent=0
    #allocation2 [shape = 'u8[4096]{0}', space=vmem, size = 0x1000, scoped, tag = 'output window, operand 0']
    #allocation3 [shape = 's32[2]{0}', space=sflag, size = 0x8, scoped, tag = 'scoped memory for diff_pool_forward.3']
    %10 = vsyncpa [#allocation3], 0
    %s11 = scalar_lea.sflag [#allocation3], 1
    %12 = vsyncpa %s11, 0
    loop: start=0, step=1, limit=4
    $region2: #{diff_pool_forward.3} parent=1 // loop_pre_header
      _
    $region3: #{diff_pool_forward.3} parent=1 // loop_header
      %s14 = sphi 0, %s18
      %p15 = scmp.ge.s32.totalorder %s14, 4
      %s24 = sphi 0, %s26
      %s27 = sphi 0, %s24
      %s28 = sphi 0, %s27
      %s44 = sphi 0, %s28
      %s50 = sphi 0, %s52
      %s53 = sphi 0, %s50
      %s54 = sphi 0, %s53
      %s70 = sphi 0, %s54
      %s76 = sphi 0, %s78
      %s79 = sphi 0, %s76
      %s80 = sphi 0, %s79
      %s96 = sphi 0, %s80
      %s100 = sphi 0, %s100
      %s102 = sphi 0, %s100
      %s103 = sphi 0, %s102
      %s117 = sphi 0, %s103
      %s121 = sphi 0, %s121
      %s123 = sphi 0, %s121
      %s124 = sphi 0, %s123
      %s138 = sphi 0, %s124
      %s144 = sphi 0, %s146
      %s147 = sphi 0, %s144
      %s148 = sphi 0, %s147
      %s164 = sphi 0, %s148
    $region4: #{diff_pool_forward.3} parent=1 // loop_header_branch
      %17 = sbr.rel (%p15) target = $region8
    $region5: #{diff_pool_forward.3} parent=1 // loop_body
      %s19 = ssub.s32 %s14, 1
      %s20 = ssub.s32 %s14, 2
      %s21 = sadd.s32 %s14, 1
      %s22 = ssub.s32 %s14, %s21
      %p23 = scmp.eq.s32.totalorder %s22, 0
      %s25 = sadd.s32 %s24, 1
      %s26 = scalar_select %p23, %s24, %s25
      %p29 = pneg %p23
      %p30 = scmp.eq.s32.totalorder %s14, 1
      %p31 = por %p29, %p30
      %p32 = scmp.ne.s32.totalorder %s24, %s27
      %p33 = scmp.eq.s32.totalorder %s14, 0
      %p34 = por %p32, %p33
      %p35 = scmp.ne.s32.totalorder %s24, %s27
      %p36 = scmp.eq.s32.totalorder %s19, 1
      %p37 = por %p35, %p36
      %p38 = scmp.ne.s32.totalorder %s27, %s28
      %p39 = scmp.eq.s32.totalorder %s19, 0
      %p40 = por %p38, %p39
      %p41 = scmp.ne.s32.totalorder %s27, %s28
      %p42 = scmp.eq.s32.totalorder %s20, 1
      %p43 = por %p41, %p42
      %p45 = scmp.ne.s32.totalorder %s28, %s44
      %p46 = scmp.eq.s32.totalorder %s20, 0
      %p47 = por %p45, %p46
      %s48 = ssub.s32 %s14, %s21
      %p49 = scmp.eq.s32.totalorder %s48, 0
      %s51 = sadd.s32 %s50, 1
      %s52 = scalar_select %p49, %s50, %s51
      %p55 = pneg %p49
      %p56 = scmp.eq.s32.totalorder %s14, 1
      %p57 = por %p55, %p56
      %p58 = scmp.ne.s32.totalorder %s50, %s53
      %p59 = scmp.eq.s32.totalorder %s14, 0
      %p60 = por %p58, %p59
      %p61 = scmp.ne.s32.totalorder %s50, %s53
      %p62 = scmp.eq.s32.totalorder %s19, 1
      %p63 = por %p61, %p62
      %p64 = scmp.ne.s32.totalorder %s53, %s54
      %p65 = scmp.eq.s32.totalorder %s19, 0
      %p66 = por %p64, %p65
      %p67 = scmp.ne.s32.totalorder %s53, %s54
      %p68 = scmp.eq.s32.totalorder %s20, 1
      %p69 = por %p67, %p68
      %p71 = scmp.ne.s32.totalorder %s54, %s70
      %p72 = scmp.eq.s32.totalorder %s20, 0
      %p73 = por %p71, %p72
      %s74 = ssub.s32 %s14, %s21
      %p75 = scmp.eq.s32.totalorder %s74, 0
      %s77 = sadd.s32 %s76, 1
      %s78 = scalar_select %p75, %s76, %s77
      %p81 = pneg %p75
      %p82 = scmp.eq.s32.totalorder %s14, 1
      %p83 = por %p81, %p82
      %p84 = scmp.ne.s32.totalorder %s76, %s79
      %p85 = scmp.eq.s32.totalorder %s14, 0
      %p86 = por %p84, %p85
      %p87 = scmp.ne.s32.totalorder %s76, %s79
      %p88 = scmp.eq.s32.totalorder %s19, 1
      %p89 = por %p87, %p88
      %p90 = scmp.ne.s32.totalorder %s79, %s80
      %p91 = scmp.eq.s32.totalorder %s19, 0
      %p92 = por %p90, %p91
      %p93 = scmp.ne.s32.totalorder %s79, %s80
      %p94 = scmp.eq.s32.totalorder %s20, 1
      %p95 = por %p93, %p94
      %p97 = scmp.ne.s32.totalorder %s80, %s96
      %p98 = scmp.eq.s32.totalorder %s20, 0
      %p99 = por %p97, %p98
      %s101 = sadd.s32 %s100, 1
      %p104 = scmp.eq.s32.totalorder %s14, 1
      %p105 = scmp.ne.s32.totalorder %s100, %s102
      %p106 = scmp.eq.s32.totalorder %s14, 0
      %p107 = por %p105, %p106
      %p108 = scmp.ne.s32.totalorder %s100, %s102
      %p109 = scmp.eq.s32.totalorder %s19, 1
      %p110 = por %p108, %p109
      %p111 = scmp.ne.s32.totalorder %s102, %s103
      %p112 = scmp.eq.s32.totalorder %s19, 0
      %p113 = por %p111, %p112
      %p114 = scmp.ne.s32.totalorder %s102, %s103
      %p115 = scmp.eq.s32.totalorder %s20, 1
      %p116 = por %p114, %p115
      %p118 = scmp.ne.s32.totalorder %s103, %s117
      %p119 = scmp.eq.s32.totalorder %s20, 0
      %p120 = por %p118, %p119
      %s122 = sadd.s32 %s121, 1
      %p125 = scmp.eq.s32.totalorder %s14, 1
      %p126 = scmp.ne.s32.totalorder %s121, %s123
      %p127 = scmp.eq.s32.totalorder %s14, 0
      %p128 = por %p126, %p127
      %p129 = scmp.ne.s32.totalorder %s121, %s123
      %p130 = scmp.eq.s32.totalorder %s19, 1
      %p131 = por %p129, %p130
      %p132 = scmp.ne.s32.totalorder %s123, %s124
      %p133 = scmp.eq.s32.totalorder %s19, 0
      %p134 = por %p132, %p133
      %p135 = scmp.ne.s32.totalorder %s123, %s124
      %p136 = scmp.eq.s32.totalorder %s20, 1
      %p137 = por %p135, %p136
      %p139 = scmp.ne.s32.totalorder %s124, %s138
      %p140 = scmp.eq.s32.totalorder %s20, 0
      %p141 = por %p139, %p140
      %s142 = ssub.s32 %s14, %s21
      %p143 = scmp.eq.s32.totalorder %s142, 0
      %s145 = sadd.s32 %s144, 1
      %s146 = scalar_select %p143, %s144, %s145
      %p149 = pneg %p143
      %p150 = scmp.eq.s32.totalorder %s14, 1
      %p151 = por %p149, %p150
      %p152 = scmp.ne.s32.totalorder %s144, %s147
      %p153 = scmp.eq.s32.totalorder %s14, 0
      %p154 = por %p152, %p153
      %p155 = scmp.ne.s32.totalorder %s144, %s147
      %p156 = scmp.eq.s32.totalorder %s19, 1
      %p157 = por %p155, %p156
      %p158 = scmp.ne.s32.totalorder %s147, %s148
      %p159 = scmp.eq.s32.totalorder %s19, 0
      %p160 = por %p158, %p159
      %p161 = scmp.ne.s32.totalorder %s147, %s148
      %p162 = scmp.eq.s32.totalorder %s20, 1
      %p163 = por %p161, %p162
      %p165 = scmp.ne.s32.totalorder %s148, %s164
      %p166 = scmp.eq.s32.totalorder %s20, 0
      %p167 = por %p165, %p166
      %p168 = scmp.le.s32.totalorder 1, %s14
      %p169 = scmp.lt.s32.totalorder %s14, 3
      %p170 = pnand %p168, %p169
      %p171 = pneg %p170
      // Predicated region
      $region9: #{diff_pool_forward.3} parent=5 // pred_check
        _
      $region10: #{diff_pool_forward.3} parent=5 // pred_check_branch
        %173 = sbr.rel (%p170) target = $region12
      $region11: #{diff_pool_forward.3} parent=5 // pred_region
        %s174 = ssub.s32 %s14, 1
        // Predicated region
        $region13: #{diff_pool_forward.3} parent=11 // pred_check
          %p175 = pneg %p113
        $region14: #{diff_pool_forward.3} parent=11 // pred_check_branch
          %177 = sbr.rel (%p175) target = $region16
        $region15: #{diff_pool_forward.3} parent=11 // pred_region
          _
        $region16: #{diff_pool_forward.3} parent=11 // pred_fallthru
          _
        // Predicated region
        $region17: #{diff_pool_forward.3} parent=11 // pred_check
          %p178 = pneg %p134
        $region18: #{diff_pool_forward.3} parent=11 // pred_check_branch
          %180 = sbr.rel (%p178) target = $region20
        $region19: #{diff_pool_forward.3} parent=11 // pred_region
          _
        $region20: #{diff_pool_forward.3} parent=11 // pred_fallthru
          _
      $region12: #{diff_pool_forward.3} parent=5 // pred_fallthru
        _
      %p181 = scmp.lt.s32.totalorder %s14, 2
      // Predicated region
      $region21: #{diff_pool_forward.3} parent=5 // pred_check
        %p182 = pneg %p181
      $region22: #{diff_pool_forward.3} parent=5 // pred_check_branch
        %184 = sbr.rel (%p182) target = $region24
      $region23: #{diff_pool_forward.3} parent=5 // pred_region
        // Predicated region
        $region25: #{diff_pool_forward.3} parent=23 // pred_check
          %p185 = pneg %p34
        $region26: #{diff_pool_forward.3} parent=23 // pred_check_branch
          %187 = sbr.rel (%p185) target = $region28
        $region27: #{diff_pool_forward.3} parent=23 // pred_region
          %p188 = scmp.lt.s32.totalorder %s14, 1
          %s189 = scalar_select %p188, %s14, 1
          %s190 = smul.addr %s189, 2
          %s191 = smul.addr %s190, 4
          %s192 = scalar_lea.vmem %s0, %s191
        $region28: #{diff_pool_forward.3} parent=23 // pred_fallthru
          _
        // Predicated region
        $region29: #{diff_pool_forward.3} parent=23 // pred_check
          %p193 = pneg %p60
        $region30: #{diff_pool_forward.3} parent=23 // pred_check_branch
          %195 = sbr.rel (%p193) target = $region32
        $region31: #{diff_pool_forward.3} parent=23 // pred_region
          %p196 = scmp.lt.s32.totalorder %s14, 1
          %s197 = scalar_select %p196, %s14, 1
          %s198 = smul.addr %s197, 4
          %s199 = scalar_lea.vmem %s1, %s198
        $region32: #{diff_pool_forward.3} parent=23 // pred_fallthru
          _
        // Predicated region
        $region33: #{diff_pool_forward.3} parent=23 // pred_check
          %p200 = pneg %p86
        $region34: #{diff_pool_forward.3} parent=23 // pred_check_branch
          %202 = sbr.rel (%p200) target = $region36
        $region35: #{diff_pool_forward.3} parent=23 // pred_region
          %p203 = scmp.lt.s32.totalorder %s14, 1
          %s204 = scalar_select %p203, %s14, 1
          %s205 = smul.addr %s204, 4
          %s206 = scalar_lea.vmem %s2, %s205
        $region36: #{diff_pool_forward.3} parent=23 // pred_fallthru
          _
      $region24: #{diff_pool_forward.3} parent=5 // pred_fallthru
        _
      %p207 = scmp.le.s32.totalorder 1, %s14
      %p208 = scmp.lt.s32.totalorder %s14, 3
      %p209 = pnand %p207, %p208
      %p210 = pneg %p209
      // Predicated region
      $region37: #{diff_pool_forward.3} parent=5 // pred_check
        _
      $region38: #{diff_pool_forward.3} parent=5 // pred_check_branch
        %212 = sbr.rel (%p209) target = $region40
      $region39: #{diff_pool_forward.3} parent=5 // pred_region
        %s213 = ssub.s32 %s14, 1
        %p214 = scmp.lt.s32.totalorder %s19, 1
        %s215 = scalar_select %p214, %s19, 1
        %s216 = smul.addr %s215, 2
        %s217 = smul.addr %s216, 4
        %s218 = scalar_lea.vmem %s0, %s217
        %p219 = pneg %p40
        %p220 = pneg %p37
        %p221 = scmp.lt.s32.totalorder %s19, 1
        %s222 = scalar_select %p221, %s19, 1
        %s223 = smul.addr %s222, 4
        %s224 = scalar_lea.vmem %s1, %s223
        %p225 = pneg %p66
        %p226 = pneg %p63
        %p227 = scmp.lt.s32.totalorder %s19, 1
        %s228 = scalar_select %p227, %s19, 1
        %s229 = smul.addr %s228, 4
        %s230 = scalar_lea.vmem %s2, %s229
        %p231 = pneg %p92
        %p232 = pneg %p89
        %p233 = pneg %p113
        %p234 = pneg %p110
        %p235 = pneg %p134
        %p236 = pneg %p131
        %p237 = pneg %p160
        %p238 = pneg %p157
        %s239 = sand.u32 %s147, 1
        %s240 = scalar_lea.sflag [#allocation3], %s239
        %s241 = sand.u32 %s147, 1
        %s242 = smul.addr %s241, 4
        %s243 = scalar_lea.vmem [#allocation2], %s242
        %p244 = scmp.lt.s32.totalorder %s19, 1
        %s245 = scalar_select %p244, %s19, 1
        %s246 = smul.addr %s245, 2
        %s247 = smul.addr %s246, 4
        %s248 = scalar_lea.vmem %s0, %s247
        %p249 = scmp.lt.s32.totalorder %s19, 1
        %s250 = scalar_select %p249, %s19, 1
        %s251 = smul.addr %s250, 4
        %s252 = scalar_lea.vmem %s1, %s251
        %p253 = scmp.lt.s32.totalorder %s19, 1
        %s254 = scalar_select %p253, %s19, 1
        %s255 = smul.addr %s254, 4
        %s256 = scalar_lea.vmem %s2, %s255
        %v257 = vld [vmem:[%s248] sm:$0xff]
        %v258 = vld [vmem:[%s252] sm:$0xf]
        %260 = vset.pattern.permute.xlu0 0
        %261 = vperm.xlu0 %260, %v258
        %v262 = vpop.permute.xlu0 %261
        %v264 = vunpack.c.l.s4 839922192
        %v265 = vunpack.c.0.s8 %v264
        %v266 = vperm.slane %v262, %v265
        %v268 = vmul.f32 %v257, %v266
        %v269 = vld [vmem:[%s256] sm:$0xf]
        %271 = vset.pattern.permute.xlu0 0
        %272 = vperm.xlu0 %271, %v269
        %v273 = vpop.permute.xlu0 %272
        %v275 = vunpack.c.l.s4 839922192
        %v276 = vunpack.c.0.s8 %v275
        %v277 = vperm.slane %v273, %v276
        %v279 = vadd.f32 %v268, %v277
        %v280 = vmax.f32 %v279, 0.0
        %v281 = vld [vmem:[%s3] sm:$0xff]
        %v282 = vld [vmem:[%s4] sm:$0xff]
        %284 = vset.pattern.permute.xlu0 0
        %285 = vperm.xlu0 %284, %v282
        %v286 = vpop.permute.xlu0 %285
        %289 = vst [vmem:[#allocation1] ss:$2 sm:$0xff] %v280
        %v290 = vld.sshfl [vmem:[#allocation1] sm:$0xff pattern:$0x75316420]
        %v291 = vld.sshfl [vmem:[#allocation1 + $0x8] sm:$0xff pattern:$0x75316420]
        %vm292 = vcmask 31744
        %v294 = vsel %vm292, %v281, 0
        %vm296 = vcmask 1043456
        %v297 = vsel %vm296, %v290, 0
        %v299 = vsel %vm296, %v291, 0
        %301 = vmatpush.msra.mxu0 0.0
        %302 = vmatpush.msra.mxu0 0.0
        %303 = vmatpush.msra.mxu0 0.0
        %304 = vmatpush.msra.mxu0 0.0
        %305 = vmatpush.msra.mxu0 0.0
        %306 = vmatpush.msra.mxu0 0.0
        %307 = vmatpush.msra.mxu0 0.0
        %308 = vmatpush.msra.mxu0 0.0
        %309 = vmatpush.msra.mxu0 0.0
        %310 = vmatpush.msra.mxu0 0.0
        %311 = vmatpush.msra.mxu0 0.0
        %312 = vmatpush.msra.mxu0 0.0
        %313 = vmatpush.msra.mxu0 0.0
        %314 = vmatpush.msra.mxu0 0.0
        %315 = vmatpush.msra.mxu0 0.0
        %316 = vmatpush.msra.mxu0 %v297
        %317 = vmatmul.f32.gmra.mxu0 %v294
        %v318 = vpop.f32.mrf.mxu0
        %v319 = vadd.f32 %v286, %v318
        %320 = vdwg.mxu0
        %321 = vmatpush.msra.mxu0 0.0
        %322 = vmatpush.msra.mxu0 0.0
        %323 = vmatpush.msra.mxu0 0.0
        %324 = vmatpush.msra.mxu0 0.0
        %325 = vmatpush.msra.mxu0 0.0
        %326 = vmatpush.msra.mxu0 0.0
        %327 = vmatpush.msra.mxu0 0.0
        %328 = vmatpush.msra.mxu0 0.0
        %329 = vmatpush.msra.mxu0 0.0
        %330 = vmatpush.msra.mxu0 0.0
        %331 = vmatpush.msra.mxu0 0.0
        %332 = vmatpush.msra.mxu0 0.0
        %333 = vmatpush.msra.mxu0 0.0
        %334 = vmatpush.msra.mxu0 0.0
        %335 = vmatpush.msra.mxu0 0.0
        %336 = vmatpush.msra.mxu0 %v299
        %337 = vmatmul.f32.gmra.mxu0 %v294
        %v338 = vpop.f32.mrf.mxu0
        %v339 = vadd.f32 %v286, %v338
        %340 = vdwg.mxu0
        %v341 = vmax.f32 %v319, %v339
        %342 = vmax.xlane.f32.xlu0 %v341
        %v343 = vpop.xlane.xlu0 %342
        %v344 = vsub.f32 %v319, %v343
        %v345 = vsub.f32 %v339, %v343
        %v346 = vmul.f32 %v344, 1.442695
        %v347 = vpow.pop %v346
        %v348 = vmul.f32 %v345, 1.442695
        %v349 = vpow.pop %v348
        %v350 = vadd.f32 %v347, %v349
        %351 = vadd.xlane.f32.xlu0 %v350
        %v352 = vpop.xlane.xlu0 %351
        %v353 = vrcp.pop %v352
        %v354 = vmul.f32 %v352, %v353
        %v355 = vsub.f32 1.0, %v354
        %v356 = vmul.f32 %v353, %v355
        %v357 = vadd.f32 %v353, %v356
        %vm358 = vweird.f32 %v352
        %vm359 = vweird.f32 %v353
        %vm360 = vmor %vm358, %vm359
        %v361 = vsel %vm360, %v353, %v357
        %v362 = vand.u32 2147483647, %v352
        %vm363 = vcmp.eq.f32.partialorder %v362, 8.507059e+37
        %v364 = vand.u32 %v352, 2147483648
        %v365 = vor.u32 1.1754944e-38, %v364
        %v366 = vsel %vm363, %v365, %v361
        %v367 = vmul.f32 %v347, %v366
        %v368 = vmul.f32 %v349, %v366
        %370 = vst [vmem:[#allocation1] ss:$2 sm:$0xff] %v257
        %v371 = vld.sshfl [vmem:[#allocation1] sm:$0xff pattern:$0x75316420]
        %v372 = vld.sshfl [vmem:[#allocation1 + $0x8] sm:$0xff pattern:$0x75316420]
        %375 = vmatpush.xpose.msra.mxu0 0.0
        %376 = vmatpush.xpose.msra.mxu0 0.0
        %377 = vmatpush.xpose.msra.mxu0 0.0
        %378 = vmatpush.xpose.msra.mxu0 0.0
        %379 = vmatpush.xpose.msra.mxu0 0.0
        %380 = vmatpush.xpose.msra.mxu0 0.0
        %381 = vmatpush.xpose.msra.mxu0 0.0
        %382 = vmatpush.xpose.msra.mxu0 0.0
        %383 = vmatpush.xpose.msra.mxu0 0.0
        %384 = vmatpush.xpose.msra.mxu0 0.0
        %385 = vmatpush.xpose.msra.mxu0 0.0
        %386 = vmatpush.xpose.msra.mxu0 0.0
        %387 = vmatpush.xpose.msra.mxu0 0.0
        %388 = vmatpush.xpose.msra.mxu0 0.0
        %389 = vmatpush.xpose.msra.mxu0 0.0
        %390 = vmatpush.xpose.msra.mxu0 %v367
        %391 = vmatmul.f32.gmra.mxu0 %v371
        %v392 = vpop.f32.mrf.mxu0
        %v393 = vadd.f32 0.0, %v392
        %394 = vdwg.mxu0
        %395 = vmatpush.xpose.msra.mxu0 0.0
        %396 = vmatpush.xpose.msra.mxu0 0.0
        %397 = vmatpush.xpose.msra.mxu0 0.0
        %398 = vmatpush.xpose.msra.mxu0 0.0
        %399 = vmatpush.xpose.msra.mxu0 0.0
        %400 = vmatpush.xpose.msra.mxu0 0.0
        %401 = vmatpush.xpose.msra.mxu0 0.0
        %402 = vmatpush.xpose.msra.mxu0 0.0
        %403 = vmatpush.xpose.msra.mxu0 0.0
        %404 = vmatpush.xpose.msra.mxu0 0.0
        %405 = vmatpush.xpose.msra.mxu0 0.0
        %406 = vmatpush.xpose.msra.mxu0 0.0
        %407 = vmatpush.xpose.msra.mxu0 0.0
        %408 = vmatpush.xpose.msra.mxu0 0.0
        %409 = vmatpush.xpose.msra.mxu0 0.0
        %410 = vmatpush.xpose.msra.mxu0 %v368
        %411 = vmatmul.f32.gmra.mxu0 %v372
        %v412 = vpop.f32.mrf.mxu0
        %v413 = vadd.f32 %v393, %v412
        %414 = vdwg.mxu0
        %vm415 = vcmask 60416
        %416 = vst.msk [vmem:[%s243] sm:$0xf] %vm415, %v413
        %s417 = sand.u32 %s147, 1
        %s418 = scalar_lea.sflag [#allocation3], %s417
        %s419 = sand.u32 %s147, 1
        %s420 = smul.addr %s419, 4
        %s421 = scalar_lea.vmem [#allocation2], %s420
        // Predicated region
        $region41: #{diff_pool_forward.3} parent=39 // pred_check
          %p422 = pneg %p157
        $region42: #{diff_pool_forward.3} parent=39 // pred_check_branch
          %424 = sbr.rel (%p422) target = $region44
        $region43: #{diff_pool_forward.3} parent=39 // pred_region
          %426 = vsyncadd %s418, 0
          %s427 = smul.addr %s19, 4
          %s428 = scalar_lea.hbm %s5, %s427
          %s430 = sshll.u32 %s421, 4
          %s431 = int_to_ptr.vmem [resolvable:$true] %s430
          %s432 = sshll.u32 %s428, 4
          %s433 = int_to_ptr.hbm [resolvable:$true] %s432
          %435 = dma.vmem_to_hbm [thread:$0]  %s431, 64, %s433, %s418
        $region44: #{diff_pool_forward.3} parent=39 // pred_fallthru
          _
      $region40: #{diff_pool_forward.3} parent=5 // pred_fallthru
        _
      %p436 = scmp.le.s32.totalorder 2, %s14
      // Predicated region
      $region45: #{diff_pool_forward.3} parent=5 // pred_check
        %p437 = pneg %p436
      $region46: #{diff_pool_forward.3} parent=5 // pred_check_branch
        %439 = sbr.rel (%p437) target = $region48
      $region47: #{diff_pool_forward.3} parent=5 // pred_region
        %s440 = ssub.s32 %s14, 2
        // Predicated region
        $region49: #{diff_pool_forward.3} parent=47 // pred_check
          %p441 = pneg %p163
        $region50: #{diff_pool_forward.3} parent=47 // pred_check_branch
          %443 = sbr.rel (%p441) target = $region52
        $region51: #{diff_pool_forward.3} parent=47 // pred_region
          %s444 = sand.u32 %s148, 1
          %s445 = scalar_lea.sflag [#allocation3], %s444
          %s446 = sand.u32 %s148, 1
          %s447 = smul.addr %s446, 4
          %s448 = scalar_lea.vmem [#allocation2], %s447
          %450 = dma.done %s445, 64
        $region52: #{diff_pool_forward.3} parent=47 // pred_fallthru
          _
      $region48: #{diff_pool_forward.3} parent=5 // pred_fallthru
        _
    $region6: #{diff_pool_forward.3} parent=1 // loop_footer
      %s18 = sadd.s32 1, %s14
    $region7: #{diff_pool_forward.3} parent=1 // loop_footer_branch
      %13 = sbr.rel target = $region3
    $region8: #{diff_pool_forward.3} parent=1 // loop_exit
      _
    %451 = vsyncpa [#allocation3], 1
    %s452 = scalar_lea.sflag [#allocation3], 1
    %453 = vsyncpa %s452, 1

</llo_original>
